<compile_context>
chip_gen: v6e
topology: v6e:2x2x1
jax: 0.10.0
libtpu: 0.0.40
codegen_flags: <defaults>
</compile_context>

<pallas_src>
import numpy as np
import jax
import jax.numpy as jnp
from jax.experimental import pallas as pl
from jax.experimental.pallas import tpu as pltpu


def _choose_tile_rows(num_rows, a, budget_bytes=8 * 1024 * 1024):
    """Rows per block: 2 inputs x 2 buffers x TR*A*4B <= budget (v5e-safe)."""
    tr = budget_bytes // (4 * max(a, 1) * 4)
    tr = int(max(8, min(tr, 4096)))
    tr = (tr // 8) * 8                       # sublane multiple
    rows_padded = ((num_rows + 7) // 8) * 8  # don't exceed (padded) row count
    return max(8, min(tr, rows_padded))


def _make_p_loss3_kernel(num_rows, tile_rows):
    needs_mask = (num_rows % tile_rows) != 0

    def kernel(gt_ref, pre_ref, part_ref):
        # Cast in-kernel: DMA stays in the input's native dtype.
        gt = gt_ref[...].astype(jnp.float32)       # (TR, A)
        pre = pre_ref[...].astype(jnp.float32)     # (TR, A)
        a = gt.shape[1]
        inv_a = jnp.float32(1.0 / a)

        # Center along the lane (A) axis.
        gt_c = gt - jnp.sum(gt, axis=1, keepdims=True) * inv_a
        pre_c = pre - jnp.sum(pre, axis=1, keepdims=True) * inv_a

        # Per-row moments (lane reductions on the XLU).
        a2 = jnp.sum(gt_c * gt_c, axis=1, keepdims=True)            # (TR, 1)
        b2 = jnp.sum(pre_c * pre_c, axis=1, keepdims=True)          # (TR, 1)
        ab = jnp.sum(gt_c * pre_c, axis=1, keepdims=True)           # (TR, 1)

        # Fused sqrt: one EUP transcendental per row.
        denom = jnp.sqrt(a2 * b2) + jnp.float32(0.01)
        pearson = ab / denom                                        # (TR, 1)

        if needs_mask:
            row = (pl.program_id(0) * tile_rows
                   + jax.lax.broadcasted_iota(jnp.int32, (tile_rows, 1), 0))
            pearson = jnp.where(row < num_rows, pearson, jnp.float32(0.0))

        # Per-block partial sum, written lane-dense (unmasked 128-lane vst).
        partial = jnp.sum(pearson, axis=(0, 1), keepdims=True)      # (1, 1)
        part_ref[...] = jnp.broadcast_to(partial, (1, 128))

    return kernel


def p_loss3(gt_lable, pre_lable):
    """Equivalent of P_loss3().forward(gt_lable, pre_lable)."""
    M, N, A = gt_lable.shape
    R = M * N
    gt2 = jnp.reshape(gt_lable, (R, A))     # native dtype; cast happens in-kernel
    pre2 = jnp.reshape(pre_lable, (R, A))

    tile_rows = _choose_tile_rows(R, A)
    grid_rows = pl.cdiv(R, tile_rows)

    partials = pl.pallas_call(
        _make_p_loss3_kernel(R, tile_rows),
        out_shape=jax.ShapeDtypeStruct((grid_rows, 128), jnp.float32),
        grid=(grid_rows,),
        in_specs=[
            pl.BlockSpec((tile_rows, A), lambda i: (i, 0)),
            pl.BlockSpec((tile_rows, A), lambda i: (i, 0)),
        ],
        out_specs=pl.BlockSpec((1, 128), lambda i: (i, 0)),
        compiler_params=pltpu.CompilerParams(
            dimension_semantics=("parallel",)),
    )(gt2, pre2)

    # Tiny cross-block reduction + finalize in the wrapper (pairwise partials).
    total = jnp.sum(partials[:, 0])
    return jnp.float32(1.0) - total / jnp.float32(R)


def _reference(gt_lable, pre_lable):
    """Pure-JAX mirror of the PyTorch forward."""
    M, N, A = gt_lable.shape
    gt = gt_lable - jnp.mean(gt_lable, axis=2, keepdims=True)
    pre = pre_lable - jnp.mean(pre_lable, axis=2, keepdims=True)
    a_pow = jnp.sqrt(jnp.sum(gt * gt, axis=2))
    b_pow = jnp.sqrt(jnp.sum(pre * pre, axis=2))
    pearson = jnp.sum(gt * pre, axis=2) / (a_pow * b_pow + 0.01)
    return 1.0 - jnp.sum(pearson) / (M * N)


if __name__ == "__main__":
    M, N, A = 2, 4, 32
    key = jax.random.PRNGKey(0)
    kg, kp = jax.random.split(key)
    gt_lable = jax.random.normal(kg, (M, N, A), dtype=jnp.float32)
    pre_lable = 0.5 * gt_lable + 0.5 * jax.random.normal(kp, (M, N, A),
                                                         dtype=jnp.float32)

    loss = p_loss3(gt_lable, pre_lable)
    jax.block_until_ready(loss)

    ref_loss = _reference(gt_lable, pre_lable)
    assert np.allclose(np.asarray(loss), np.asarray(ref_loss),
                       rtol=1e-5, atol=1e-5), (loss, ref_loss)

    print("KERNEL_OK")
</pallas_src>

<mosaic_0001>
module attributes {stable_mosaic.version = 11 : i64} {
  func.func @kernel(%arg0: i32, %arg1: memref<8x32xf32, #tpu.memory_space<vmem>>, %arg2: memref<8x32xf32, #tpu.memory_space<vmem>>, %arg3: memref<1x128xf32, #tpu.memory_space<vmem>>) attributes {dimension_semantics = [#tpu.dimension_semantics<parallel>], iteration_bounds = array<i64: 1>, scalar_prefetch = 0 : i64, scratch_operands = 0 : i64, tpu.core_type = #tpu.core_type<tc>, window_params = [{transform_indices = @transform_0, window_bounds = array<i64: 8, 32>}, {transform_indices = @transform_1, window_bounds = array<i64: 8, 32>}, {transform_indices = @transform_2, window_bounds = array<i64: 1, 128>}]} {
    %c0 = arith.constant 0 : index
    %c0_0 = arith.constant 0 : index
    %0 = vector.load %arg1[%c0, %c0_0] : memref<8x32xf32, #tpu.memory_space<vmem>>, vector<8x32xf32>
    %c0_1 = arith.constant 0 : index
    %c0_2 = arith.constant 0 : index
    %1 = vector.load %arg2[%c0_1, %c0_2] : memref<8x32xf32, #tpu.memory_space<vmem>>, vector<8x32xf32>
    %cst = arith.constant dense<0.000000e+00> : vector<8xf32>
    %2 = vector.multi_reduction <add>, %0, %cst [1] : vector<8x32xf32> to vector<8xf32>
    %3 = vector.shape_cast %2 : vector<8xf32> to vector<8x1xf32>
    %cst_3 = arith.constant 3.125000e-02 : f32
    %4 = vector.broadcast %cst_3 : f32 to vector<8x1xf32>
    %5 = arith.mulf %3, %4 : vector<8x1xf32>
    %6 = vector.broadcast %5 : vector<8x1xf32> to vector<8x32xf32>
    %7 = arith.subf %0, %6 : vector<8x32xf32>
    %cst_4 = arith.constant dense<0.000000e+00> : vector<8xf32>
    %8 = vector.multi_reduction <add>, %1, %cst_4 [1] : vector<8x32xf32> to vector<8xf32>
    %9 = vector.shape_cast %8 : vector<8xf32> to vector<8x1xf32>
    %cst_5 = arith.constant 3.125000e-02 : f32
    %10 = vector.broadcast %cst_5 : f32 to vector<8x1xf32>
    %11 = arith.mulf %9, %10 : vector<8x1xf32>
    %12 = vector.broadcast %11 : vector<8x1xf32> to vector<8x32xf32>
    %13 = arith.subf %1, %12 : vector<8x32xf32>
    %14 = arith.mulf %7, %7 : vector<8x32xf32>
    %cst_6 = arith.constant dense<0.000000e+00> : vector<8xf32>
    %15 = vector.multi_reduction <add>, %14, %cst_6 [1] : vector<8x32xf32> to vector<8xf32>
    %16 = vector.shape_cast %15 : vector<8xf32> to vector<8x1xf32>
    %17 = arith.mulf %13, %13 : vector<8x32xf32>
    %cst_7 = arith.constant dense<0.000000e+00> : vector<8xf32>
    %18 = vector.multi_reduction <add>, %17, %cst_7 [1] : vector<8x32xf32> to vector<8xf32>
    %19 = vector.shape_cast %18 : vector<8xf32> to vector<8x1xf32>
    %20 = arith.mulf %7, %13 : vector<8x32xf32>
    %cst_8 = arith.constant dense<0.000000e+00> : vector<8xf32>
    %21 = vector.multi_reduction <add>, %20, %cst_8 [1] : vector<8x32xf32> to vector<8xf32>
    %22 = vector.shape_cast %21 : vector<8xf32> to vector<8x1xf32>
    %23 = arith.mulf %16, %19 : vector<8x1xf32>
    %24 = math.sqrt %23 : vector<8x1xf32>
    %cst_9 = arith.constant 0.00999999977 : f32
    %25 = vector.broadcast %cst_9 : f32 to vector<8x1xf32>
    %26 = arith.addf %24, %25 : vector<8x1xf32>
    %27 = arith.divf %22, %26 : vector<8x1xf32>
    %28 = vector.shape_cast %27 : vector<8x1xf32> to vector<1x8x1xf32>
    %cst_10 = arith.constant dense<0.000000e+00> : vector<1xf32>
    %29 = vector.multi_reduction <add>, %28, %cst_10 [1, 2] : vector<1x8x1xf32> to vector<1xf32>
    %30 = vector.shape_cast %29 : vector<1xf32> to vector<1x1x1xf32>
    %31 = vector.extract %30[0, 0, 0] : f32 from vector<1x1x1xf32>
    %32 = vector.broadcast %31 : f32 to vector<1x1xf32>
    %33 = vector.shape_cast %32 : vector<1x1xf32> to vector<1x1xf32>
    %34 = vector.broadcast %33 : vector<1x1xf32> to vector<1x128xf32>
    %c0_11 = arith.constant 0 : index
    %c0_12 = arith.constant 0 : index
    %35 = vector.load %arg3[%c0_11, %c0_12] : memref<1x128xf32, #tpu.memory_space<vmem>>, vector<1x128xf32>
    tpu.vector_store %arg3[%c0_11, %c0_12], %34 {strides = array<i32>} : memref<1x128xf32, #tpu.memory_space<vmem>>, vector<1x128xf32>,
    return
  }
  func.func @transform_0(%arg0: i32) -> (i32, i32) {
    %c0_i32 = arith.constant 0 : i32
    %c0_i32_0 = arith.constant 0 : i32
    return %arg0, %c0_i32 : i32, i32
  }
  func.func @transform_1(%arg0: i32) -> (i32, i32) {
    %c0_i32 = arith.constant 0 : i32
    %c0_i32_0 = arith.constant 0 : i32
    return %arg0, %c0_i32 : i32, i32
  }
  func.func @transform_2(%arg0: i32) -> (i32, i32) {
    %c0_i32 = arith.constant 0 : i32
    %c0_i32_0 = arith.constant 0 : i32
    return %arg0, %c0_i32 : i32, i32
  }
}

</mosaic_0001>

<llo_original>
// kernel: tpu_custom_call.1
$region0: #{tpu_custom_call.1}
  #allocation0 [shape = 'u32[]', space=smem, size = 0x4, offset = 0x4, fixed_abs, tag = 'smem constant byte address 0x4 - core index']
  #allocation1 [shape = 'u32[144,128]{1,0:T(1,128)}', space=vmem, size = 0x12000, scoped, tag = 'internal scratch']
  %s0 = inlined_call_operand.hbm [shape: f32[8,32], index: 0, kind: input, shape index: {}]
  %s1 = inlined_call_operand.hbm [shape: f32[8,32], index: 1, kind: input, shape index: {}]
  %s2 = inlined_call_operand.hbm [shape: f32[1,128], index: 2, kind: output, shape index: {}]
  %s3 = sld [smem:[#allocation0]]
  $region26: #{tpu_custom_call.1} parent=0
    _
  %s5 = ssub.s32 1, %s3
  %s6 = scalar_select 0, %s5, %s3
  $region1: #{tpu_custom_call.1} parent=0
    #allocation2 [shape = 'u8[4096]{0}', space=vmem, size = 0x1000, scoped, tag = 'input window, operand 0, single buffered']
    #allocation3 [shape = 's32[1]{0}', space=sflag, size = 0x4, scoped, tag = 'scoped memory for tpu_custom_call.1']
    #allocation4 [shape = 's32[1]{0}', space=sflag, size = 0x4, scoped, tag = 'scoped memory for tpu_custom_call.1']
    #allocation5 [shape = 'u8[4096]{0}', space=vmem, size = 0x1000, scoped, tag = 'input window, operand 1, single buffered']
    #allocation6 [shape = 's32[1]{0}', space=sflag, size = 0x4, scoped, tag = 'scoped memory for tpu_custom_call.1']
    #allocation7 [shape = 'u8[512]{0}', space=vmem, size = 0x400, scoped, tag = 'output window, operand 0, single buffered']
    %7 = vsyncpa [#allocation3], 0
    %8 = vsyncpa [#allocation6], 0
    %9 = vsyncpa [#allocation4], 0
    // Predicated region
    $region2: #{tpu_custom_call.1} parent=1 // pred_check
      _
    $region3: #{tpu_custom_call.1} parent=1 // pred_check_branch
      %11 = sbr.rel (0) target = $region5
    $region4: #{tpu_custom_call.1} parent=1 // pred_region
      %s13 = ssub.s32 128, 128
      %14 = vsyncadd [#allocation3], %s13
      %s16 = sshll.u32 [#allocation2], 4
      %s17 = int_to_ptr.vmem [resolvable:$true] %s16
      %19 = dma.hbm_to_vmem [thread:$0]  %s0, 128, %s17, [#allocation3]
    $region5: #{tpu_custom_call.1} parent=1 // pred_fallthru
      _
    // Predicated region
    $region6: #{tpu_custom_call.1} parent=1 // pred_check
      _
    $region7: #{tpu_custom_call.1} parent=1 // pred_check_branch
      %21 = sbr.rel (0) target = $region9
    $region8: #{tpu_custom_call.1} parent=1 // pred_region
      %s23 = ssub.s32 128, 128
      %24 = vsyncadd [#allocation6], %s23
      %s26 = sshll.u32 [#allocation5], 4
      %s27 = int_to_ptr.vmem [resolvable:$true] %s26
      %29 = dma.hbm_to_vmem [thread:$0]  %s1, 128, %s27, [#allocation6]
    $region9: #{tpu_custom_call.1} parent=1 // pred_fallthru
      _
    // Predicated region
    $region10: #{tpu_custom_call.1} parent=1 // pred_check
      _
    $region11: #{tpu_custom_call.1} parent=1 // pred_check_branch
      %31 = sbr.rel (0) target = $region13
    $region12: #{tpu_custom_call.1} parent=1 // pred_region
      %32 = dma.done [#allocation3], 128
    $region13: #{tpu_custom_call.1} parent=1 // pred_fallthru
      _
    // Predicated region
    $region14: #{tpu_custom_call.1} parent=1 // pred_check
      _
    $region15: #{tpu_custom_call.1} parent=1 // pred_check_branch
      %34 = sbr.rel (0) target = $region17
    $region16: #{tpu_custom_call.1} parent=1 // pred_region
      %35 = dma.done [#allocation6], 128
    $region17: #{tpu_custom_call.1} parent=1 // pred_fallthru
      _
    %v36 = vld [vmem:[#allocation2] sm:$0xff]
    %v37 = vld [vmem:[#allocation5] sm:$0xff]
    %vm38 = vcmask 261120
    %v39 = vsel %vm38, %v36, 0.0
    %40 = vadd.xlane.f32.xlu0 %v39
    %v41 = vpop.xlane.xlu0 %40
    %v42 = vmul.f32 %v41, 0.03125
    %v43 = vsub.f32 %v36, %v42
    %v44 = vsel %vm38, %v37, 0.0
    %45 = vadd.xlane.f32.xlu0 %v44
    %v46 = vpop.xlane.xlu0 %45
    %v47 = vmul.f32 %v46, 0.03125
    %v48 = vsub.f32 %v37, %v47
    %v49 = vmul.f32 %v43, %v43
    %v50 = vsel %vm38, %v49, 0.0
    %51 = vadd.xlane.f32.xlu0 %v50
    %v52 = vpop.xlane.xlu0 %51
    %v53 = vmul.f32 %v48, %v48
    %v54 = vsel %vm38, %v53, 0.0
    %55 = vadd.xlane.f32.xlu0 %v54
    %v56 = vpop.xlane.xlu0 %55
    %v57 = vmul.f32 %v43, %v48
    %v58 = vsel %vm38, %v57, 0.0
    %59 = vadd.xlane.f32.xlu0 %v58
    %v60 = vpop.xlane.xlu0 %59
    %v61 = vmul.f32 %v52, %v56
    %v62 = vrsqrt.pop %v61
    %v63 = vmul.f32 %v61, %v62
    %vm64 = vcmp.eq.f32.partialorder %v61, inf
    %v65 = vsel %vm64, %v61, %v63
    %vm66 = vcmp.eq.f32.partialorder %v61, 0.0
    %v67 = vand.u32 %v61, 2147483648
    %v68 = vsel %vm66, %v67, %v65
    %v69 = vadd.f32 %v68, 0.01
    %v70 = vrcp.pop %v69
    %v71 = vmul.f32 %v60, %v70
    %vm72 = vcmask 7168
    %v73 = vsel %vm72, %v71, 0.0
    %74 = vadd.xlane.f32.xlu0 %v73
    %v75 = vpop.xlane.xlu0 %74
    %v76 = vrot.slane %v75, 4
    %v77 = vadd.f32 %v75, %v76
    %v78 = vrot.slane %v77, 2
    %v79 = vadd.f32 %v77, %v78
    %v80 = vrot.slane %v79, 1
    %v81 = vadd.f32 %v79, %v80
    %s82 = vtos %v81
    %v83 = vstv %s82
    %84 = vst [vmem:[#allocation7] sm:$0x1] %v83
    // Predicated region
    $region18: #{tpu_custom_call.1} parent=1 // pred_check
      _
    $region19: #{tpu_custom_call.1} parent=1 // pred_check_branch
      %86 = sbr.rel (0) target = $region21
    $region20: #{tpu_custom_call.1} parent=1 // pred_region
      %s88 = ssub.s32 16, 16
      %89 = vsyncadd [#allocation4], %s88
      %s91 = sshll.u32 [#allocation7], 4
      %s92 = int_to_ptr.vmem [resolvable:$true] %s91
      %94 = dma.vmem_to_hbm [thread:$0]  %s92, 16, %s2, [#allocation4]
    $region21: #{tpu_custom_call.1} parent=1 // pred_fallthru
      _
    // Predicated region
    $region22: #{tpu_custom_call.1} parent=1 // pred_check
      _
    $region23: #{tpu_custom_call.1} parent=1 // pred_check_branch
      %96 = sbr.rel (0) target = $region25
    $region24: #{tpu_custom_call.1} parent=1 // pred_region
      %97 = dma.done [#allocation4], 16
    $region25: #{tpu_custom_call.1} parent=1 // pred_fallthru
      _
    %98 = vsyncpa [#allocation3], 1
    %99 = vsyncpa [#allocation6], 1
    %100 = vsyncpa [#allocation4], 1

</llo_original>
